<compile_context>
chip_gen: v5e
topology: v5e:2x2
jax: 0.10.0
libtpu: 0.0.40
codegen_flags: <defaults>
</compile_context>

<pallas_src>
import functools

import jax
import jax.numpy as jnp
import numpy as np
from jax.experimental import pallas as pl
from jax.experimental.pallas import tpu as pltpu


_NEG_INIT = -1e30                     # safe "minus infinity" for the running max
_TARGET_TILE_BYTES = 4 * 1024 * 1024  # ~4 MiB vocab tiles amortize grid-step overhead


def _round_up(x, m):
    return (x + m - 1) // m * m


def _vmem_limit_bytes():
    """Scoped-VMEM budget per chip generation (~3/4 of physical VMEM)."""
    try:
        cap = pltpu.get_tpu_info().vmem_capacity_bytes
    except Exception:
        cap = 64 * 1024 * 1024        # conservative default (v7x per-TC VMEM)
    limit = int(cap) * 3 // 4
    return max(32 * 1024 * 1024, min(limit, 110 * 1024 * 1024))


def _pick_tile_v(V, E_pad, itemsize, vmem_limit, tile_v=None):
    """Vocab tile: ~4 MiB target, double-buffered stream <= ~1/4 of scoped VMEM."""
    v_cap = _round_up(max(V, 1), 128)
    if tile_v is not None:
        return max(128, min(_round_up(tile_v, 128), v_cap))
    row_bytes = E_pad * itemsize
    tv = max(128, (_TARGET_TILE_BYTES // row_bytes) // 128 * 128)
    while tv > 128 and 2 * tv * row_bytes > vmem_limit // 4:
        tv = max(128, (tv // 2) // 128 * 128)
    return min(tv, v_cap)


def _pick_tile_b(B, TV, E_pad, itemsize, vmem_limit):
    """Batch tile: <=256 rows, bounded so (TB, TV) f32 temporaries fit in VMEM."""
    tb = min(_round_up(B, 8), 256)
    while tb > 8 and 3 * tb * TV * 4 + 4 * tb * E_pad * itemsize > vmem_limit // 3:
        tb = max(8, (tb // 2) // 8 * 8)
    return tb


def _plan(V, E, B, compute_dtype, tile_v=None):
    op_dtype = jnp.dtype(compute_dtype)
    itemsize = op_dtype.itemsize
    E_pad = _round_up(E, 128)
    vmem_limit = _vmem_limit_bytes()
    TV = _pick_tile_v(V, E_pad, itemsize, vmem_limit, tile_v)
    V_pad = _round_up(V, TV)
    TB = _pick_tile_b(B, TV, E_pad, itemsize, vmem_limit)
    B_pad = _round_up(B, TB)
    return dict(op_dtype=op_dtype, itemsize=itemsize, E_pad=E_pad,
                TV=TV, V_pad=V_pad, TB=TB, B_pad=B_pad, vmem_limit=vmem_limit)


def _analyze_vocab_indices(all_vocabs):
    """(is_concrete, is_identity). Validates the dedup assumption when concrete."""
    try:
        av = np.asarray(all_vocabs)
    except Exception:             # traced (under jit): skip host-side analysis
        return False, False
    if not (av == av[0]).all():
        raise ValueError(
            "cbow_forward dedups the vocab gather; all rows of all_vocabs must be "
            "identical (true per-row negative sampling needs a scalar-prefetch "
            "gather path).")
    return True, bool(np.array_equal(av[0], np.arange(av.shape[1])))


def prepare_vocab_operand(emb_outside, *, compute_dtype=jnp.bfloat16, tile_v=None):
    """Pad + cast the (V, E) outside-embedding table ONCE (identity all_vocabs case).

    Doing this outside the per-step forward removes the per-call gather/pad/cast
    HBM passes over the full table (the dominant cost at small batch).
    """
    V, E = emb_outside.shape
    p = _plan(V, E, 1, compute_dtype, tile_v)
    return jnp.pad(emb_outside.astype(p["op_dtype"]),
                   ((0, p["V_pad"] - V), (0, p["E_pad"] - E)))


def cbow_partial_kernel(ce_ref, oe_ref, vocab_ref, m_ref, s_ref, top_ref, *,
                        vocab, tile_v):
    """One (batch-tile, vocab-tile) grid step.

    Accumulates a per-row online log-sum-exp of lower = ce @ vocab^T directly in
    the resident output blocks (m = running row max, s = running row sum(exp)),
    and writes the per-row `top` term once per batch tile.
    """
    k = pl.program_id(1)

    @pl.when(k == 0)
    def _init():
        m_ref[...] = jnp.full(m_ref.shape, _NEG_INIT, dtype=m_ref.dtype)
        s_ref[...] = jnp.zeros(s_ref.shape, dtype=s_ref.dtype)
        top_ref[...] = jnp.sum(
            oe_ref[...].astype(jnp.float32) * ce_ref[...].astype(jnp.float32),
            axis=1, keepdims=True)

    # lower[b, j] = ce[b] . vocab[j] — dense MXU matmul in the stored (bf16) dtype,
    # f32 accumulation; trans_b contraction avoids relayout of the (TV, E_pad) tile.
    lower = jax.lax.dot_general(
        ce_ref[...], vocab_ref[...],
        dimension_numbers=(((1,), (1,)), ((), ())),
        preferred_element_type=jnp.float32)                       # (TB, TV) f32

    if vocab % tile_v != 0:   # static: mask padded vocab columns on the ragged tile
        cols = jax.lax.broadcasted_iota(jnp.int32, lower.shape, 1) + k * tile_v
        lower = jnp.where(cols < vocab, lower, jnp.float32(_NEG_INIT))

    # Flash-style online LSE across vocab tiles (running max / running sum).
    m_old = m_ref[...]
    m_new = jnp.maximum(m_old, jnp.max(lower, axis=1, keepdims=True))
    s_ref[...] = s_ref[...] * jnp.exp(m_old - m_new) + jnp.sum(
        jnp.exp(lower - m_new), axis=1, keepdims=True)
    m_ref[...] = m_new


def cbow_forward(emb_center, emb_outside, center_word, outside_word, all_vocabs,
                 *, compute_dtype=jnp.bfloat16, tile_v=None, prepared_vocab=None):
    """Returns the scalar CBOW loss (float32)."""
    B = center_word.shape[0]
    V = all_vocabs.shape[1]
    E = emb_center.shape[1]

    p = _plan(V, E, B, compute_dtype, tile_v)
    op_dtype, itemsize = p["op_dtype"], p["itemsize"]
    E_pad, TV, V_pad, TB, B_pad = p["E_pad"], p["TV"], p["V_pad"], p["TB"], p["B_pad"]
    num_v_tiles = V_pad // TV
    num_b_tiles = B_pad // TB

    _, is_identity = _analyze_vocab_indices(all_vocabs)

    # Per-example embedding row gathers stay in JAX (B rows, cheap).
    ce = emb_center[center_word.reshape(-1)].astype(op_dtype)     # (B, E)
    oe = emb_outside[outside_word.reshape(-1)].astype(op_dtype)   # (B, E)
    ce_p = jnp.pad(ce, ((0, B_pad - B), (0, E_pad - E)))
    oe_p = jnp.pad(oe, ((0, B_pad - B), (0, E_pad - E)))

    # Vocab operand: prefer the pre-padded / pre-cast table (zero extra HBM passes).
    # TODO(synk): on v7x, an fp8 vocab stream (ce kept bf16, f32 accumulation) would
    # halve the dominant HBM bytes again if loss quality tolerates it.
    if (prepared_vocab is not None and is_identity
            and prepared_vocab.shape == (V_pad, E_pad)
            and prepared_vocab.dtype == op_dtype):
        vr_p = prepared_vocab
    else:
        rows = emb_outside if is_identity else emb_outside[all_vocabs[0]]
        # TODO(synk): true per-row negative sampling (distinct all_vocabs rows) needs
        # a PrefetchScalarGridSpec row-gather path instead of this dedup.
        vr_p = jnp.pad(rows.astype(op_dtype),
                       ((0, V_pad - V), (0, E_pad - E)))

    kernel = functools.partial(cbow_partial_kernel, vocab=V, tile_v=TV)

    cost = pl.CostEstimate(
        flops=2 * B_pad * V_pad * E_pad + 2 * B_pad * E_pad,
        transcendentals=B_pad * V_pad,
        bytes_accessed=(num_b_tiles * V_pad * E_pad + 2 * B_pad * E_pad) * itemsize
                       + 3 * B_pad * 4,
    )

    vocab_spec_kwargs = {}
    if (num_v_tiles > 1 and TV * E_pad * itemsize < (2 << 20)
            and hasattr(pl, "Buffered")):
        # Small-tile regime only: deepen the pipeline so DMA issue latency stays hidden.
        vocab_spec_kwargs["pipeline_mode"] = pl.Buffered(3)

    out_shape = [jax.ShapeDtypeStruct((B_pad, 1), jnp.float32)] * 3

    m_rows, s_rows, top_rows = pl.pallas_call(
        kernel,
        out_shape=out_shape,
        grid_spec=pltpu.PrefetchScalarGridSpec(
            num_scalar_prefetch=0,
            grid=(num_b_tiles, num_v_tiles),
            in_specs=[
                pl.BlockSpec((TB, E_pad), lambda b, k: (b, 0)),    # center rows (resident)
                pl.BlockSpec((TB, E_pad), lambda b, k: (b, 0)),    # outside rows (resident)
                pl.BlockSpec((TV, E_pad), lambda b, k: (k, 0),
                             **vocab_spec_kwargs),                  # streamed vocab tile
            ],
            out_specs=[
                pl.BlockSpec((TB, 1), lambda b, k: (b, 0)),        # running row max
                pl.BlockSpec((TB, 1), lambda b, k: (b, 0)),        # running row sum(exp)
                pl.BlockSpec((TB, 1), lambda b, k: (b, 0)),        # per-row top term
            ],
        ),
        compiler_params=pltpu.CompilerParams(
            dimension_semantics=("parallel", "arbitrary"),
            vmem_limit_bytes=p["vmem_limit"],
        ),
        cost_estimate=cost,
    )(ce_p, oe_p, vr_p)

    # Tiny epilogue: combine the per-row partials (padded batch rows are sliced off).
    m_b = m_rows[:B, 0]
    s_b = s_rows[:B, 0]
    top_b = top_rows[:B, 0]
    m_glob = jnp.max(m_b)
    log_lower_sum = m_glob + jnp.log(jnp.sum(s_b * jnp.exp(m_b - m_glob)))
    return log_lower_sum - jnp.sum(top_b) / B


def cbow_reference(emb_center, emb_outside, center_word, outside_word, all_vocabs):
    """Pure-JAX reference mirroring the PyTorch forward exactly."""
    ce = emb_center[center_word]                  # (B, 1, E)
    oe = emb_outside[outside_word]                # (B, 1, E)
    av = emb_outside[all_vocabs]                  # (B, V, E)
    hp = jax.lax.Precision.HIGHEST
    top = jnp.einsum("boe,bce->bo", oe, ce, precision=hp)        # (B, 1)
    lower = jnp.einsum("bve,bce->bv", av, ce, precision=hp)      # (B, V)
    lower_sum = jnp.sum(jnp.exp(lower))
    return -jnp.mean(jnp.log(jnp.exp(top) / lower_sum))


if __name__ == "__main__":
    voc_size, emb_size, batch = 32, 32, 2

    key = jax.random.PRNGKey(0)
    k1, k2, k3, k4 = jax.random.split(key, 4)

    # nn.Embedding default init ~ N(0, 1); deterministic synthetic weights.
    emb_center = jax.random.normal(k1, (voc_size, emb_size), dtype=jnp.float32)
    emb_outside = jax.random.normal(k2, (voc_size, emb_size), dtype=jnp.float32)

    center_word = jax.random.randint(k3, (batch, 1), 0, voc_size, dtype=jnp.int32)
    outside_word = jax.random.randint(k4, (batch, 1), 0, voc_size, dtype=jnp.int32)
    all_vocabs = jnp.tile(jnp.arange(voc_size, dtype=jnp.int32)[None, :], (batch, 1))

    ref = cbow_reference(emb_center, emb_outside, center_word, outside_word, all_vocabs)

    # Default path: bf16 streamed operands with the table prepared once (no per-call
    # gather/pad/cast HBM passes). Loose tolerance vs the f32 HIGHEST reference.
    prepared = prepare_vocab_operand(emb_outside, compute_dtype=jnp.bfloat16)
    loss_bf16 = cbow_forward(emb_center, emb_outside, center_word, outside_word,
                             all_vocabs, prepared_vocab=prepared)
    jax.block_until_ready(loss_bf16)
    assert jnp.allclose(loss_bf16, ref, rtol=3e-2, atol=3e-2), (loss_bf16, ref)

    # Full-precision path with tight tolerance.
    loss_f32 = cbow_forward(emb_center, emb_outside, center_word, outside_word,
                            all_vocabs, compute_dtype=jnp.float32)
    jax.block_until_ready(loss_f32)
    assert jnp.allclose(loss_f32, ref, rtol=1e-4, atol=1e-4), (loss_f32, ref)

    print("KERNEL_OK")
</pallas_src>

<mosaic_0001>
module attributes {stable_mosaic.version = 11 : i64} {
  func.func @cbow_partial_kernel(%arg0: i32, %arg1: i32, %arg2: memref<8x128xbf16, #tpu.memory_space<vmem>>, %arg3: memref<8x128xbf16, #tpu.memory_space<vmem>>, %arg4: memref<128x128xbf16, #tpu.memory_space<vmem>>, %arg5: memref<8x1xf32, #tpu.memory_space<vmem>>, %arg6: memref<8x1xf32, #tpu.memory_space<vmem>>, %arg7: memref<8x1xf32, #tpu.memory_space<vmem>>) attributes {dimension_semantics = [#tpu.dimension_semantics<parallel>, #tpu.dimension_semantics<arbitrary>], iteration_bounds = array<i64: 1, 1>, scalar_prefetch = 0 : i64, scratch_operands = 0 : i64, tpu.core_type = #tpu.core_type<tc>, window_params = [{transform_indices = @transform_0, window_bounds = array<i64: 8, 128>}, {transform_indices = @transform_1, window_bounds = array<i64: 8, 128>}, {transform_indices = @transform_2, window_bounds = array<i64: 128, 128>}, {transform_indices = @transform_3, window_bounds = array<i64: 8, 1>}, {transform_indices = @transform_4, window_bounds = array<i64: 8, 1>}, {transform_indices = @transform_5, window_bounds = array<i64: 8, 1>}]} {
    %c0_i32 = arith.constant 0 : i32
    %0 = arith.cmpi eq, %arg1, %c0_i32 : i32
    %1 = arith.extui %0 : i1 to i32
    %c0_i32_0 = arith.constant 0 : i32
    %2 = arith.cmpi ne, %1, %c0_i32_0 : i32
    scf.if %2 {
      %cst_15 = arith.constant -1.000000e+30 : f32
      %30 = vector.broadcast %cst_15 : f32 to vector<8x1xf32>
      %c0_16 = arith.constant 0 : index
      %c0_17 = arith.constant 0 : index
      %31 = vector.load %arg5[%c0_16, %c0_17] : memref<8x1xf32, #tpu.memory_space<vmem>>, vector<8x1xf32>
      tpu.vector_store %arg5[%c0_16, %c0_17], %30 {strides = array<i32>} : memref<8x1xf32, #tpu.memory_space<vmem>>, vector<8x1xf32>,
      %cst_18 = arith.constant 0.000000e+00 : f32
      %32 = vector.broadcast %cst_18 : f32 to vector<8x1xf32>
      %c0_19 = arith.constant 0 : index
      %c0_20 = arith.constant 0 : index
      %33 = vector.load %arg6[%c0_19, %c0_20] : memref<8x1xf32, #tpu.memory_space<vmem>>, vector<8x1xf32>
      tpu.vector_store %arg6[%c0_19, %c0_20], %32 {strides = array<i32>} : memref<8x1xf32, #tpu.memory_space<vmem>>, vector<8x1xf32>,
      %c0_21 = arith.constant 0 : index
      %c0_22 = arith.constant 0 : index
      %34 = vector.load %arg3[%c0_21, %c0_22] : memref<8x128xbf16, #tpu.memory_space<vmem>>, vector<8x128xbf16>
      %35 = arith.extf %34 : vector<8x128xbf16> to vector<8x128xf32>
      %c0_23 = arith.constant 0 : index
      %c0_24 = arith.constant 0 : index
      %36 = vector.load %arg2[%c0_23, %c0_24] : memref<8x128xbf16, #tpu.memory_space<vmem>>, vector<8x128xbf16>
      %37 = arith.extf %36 : vector<8x128xbf16> to vector<8x128xf32>
      %38 = arith.mulf %35, %37 : vector<8x128xf32>
      %cst_25 = arith.constant dense<0.000000e+00> : vector<8xf32>
      %39 = vector.multi_reduction <add>, %38, %cst_25 [1] : vector<8x128xf32> to vector<8xf32>
      %40 = vector.shape_cast %39 : vector<8xf32> to vector<8x1xf32>
      %c0_26 = arith.constant 0 : index
      %c0_27 = arith.constant 0 : index
      %41 = vector.load %arg7[%c0_26, %c0_27] : memref<8x1xf32, #tpu.memory_space<vmem>>, vector<8x1xf32>
      tpu.vector_store %arg7[%c0_26, %c0_27], %40 {strides = array<i32>} : memref<8x1xf32, #tpu.memory_space<vmem>>, vector<8x1xf32>,
    } else {
    }
    %c0 = arith.constant 0 : index
    %c0_1 = arith.constant 0 : index
    %3 = vector.load %arg2[%c0, %c0_1] : memref<8x128xbf16, #tpu.memory_space<vmem>>, vector<8x128xbf16>
    %c0_2 = arith.constant 0 : index
    %c0_3 = arith.constant 0 : index
    %4 = vector.load %arg4[%c0_2, %c0_3] : memref<128x128xbf16, #tpu.memory_space<vmem>>, vector<128x128xbf16>
    %cst = arith.constant dense<0.000000e+00> : vector<8x128xf32>
    %5 = tpu.matmul %3, %4, %cst {dimension_numbers = #tpu.dot_dimension_numbers<[1], [1], [0], [0], [0, 0, 1, 0], [], []>} : vector<8x128xbf16>, vector<128x128xbf16>, vector<8x128xf32> -> vector<8x128xf32>
    %6 = tpu.iota {dimensions = array<i32: 1>} : vector<8x128xi32>
    %c128_i32 = arith.constant 128 : i32
    %7 = arith.muli %arg1, %c128_i32 : i32
    %8 = vector.broadcast %7 : i32 to vector<8x128xi32>
    %9 = arith.addi %6, %8 : vector<8x128xi32>
    %c32_i32 = arith.constant 32 : i32
    %10 = vector.broadcast %c32_i32 : i32 to vector<8x128xi32>
    %11 = arith.cmpi slt, %9, %10 : vector<8x128xi32>
    %cst_4 = arith.constant -1.000000e+30 : f32
    %12 = vector.broadcast %cst_4 : f32 to vector<8x128xf32>
    %13 = arith.select %11, %5, %12 : vector<8x128xi1>, vector<8x128xf32>
    %c0_5 = arith.constant 0 : index
    %c0_6 = arith.constant 0 : index
    %14 = vector.load %arg5[%c0_5, %c0_6] : memref<8x1xf32, #tpu.memory_space<vmem>>, vector<8x1xf32>
    %cst_7 = arith.constant dense<0xFF800000> : vector<8xf32>
    %15 = vector.multi_reduction <maximumf>, %13, %cst_7 [1] : vector<8x128xf32> to vector<8xf32>
    %16 = vector.shape_cast %15 : vector<8xf32> to vector<8x1xf32>
    %17 = arith.maximumf %14, %16 : vector<8x1xf32>
    %c0_8 = arith.constant 0 : index
    %c0_9 = arith.constant 0 : index
    %18 = vector.load %arg6[%c0_8, %c0_9] : memref<8x1xf32, #tpu.memory_space<vmem>>, vector<8x1xf32>
    %19 = arith.subf %14, %17 : vector<8x1xf32>
    %20 = math.exp %19 : vector<8x1xf32>
    %21 = arith.mulf %18, %20 : vector<8x1xf32>
    %22 = vector.broadcast %17 : vector<8x1xf32> to vector<8x128xf32>
    %23 = arith.subf %13, %22 : vector<8x128xf32>
    %24 = math.exp %23 : vector<8x128xf32>
    %cst_10 = arith.constant dense<0.000000e+00> : vector<8xf32>
    %25 = vector.multi_reduction <add>, %24, %cst_10 [1] : vector<8x128xf32> to vector<8xf32>
    %26 = vector.shape_cast %25 : vector<8xf32> to vector<8x1xf32>
    %27 = arith.addf %21, %26 : vector<8x1xf32>
    %c0_11 = arith.constant 0 : index
    %c0_12 = arith.constant 0 : index
    %28 = vector.load %arg6[%c0_11, %c0_12] : memref<8x1xf32, #tpu.memory_space<vmem>>, vector<8x1xf32>
    tpu.vector_store %arg6[%c0_11, %c0_12], %27 {strides = array<i32>} : memref<8x1xf32, #tpu.memory_space<vmem>>, vector<8x1xf32>,
    %c0_13 = arith.constant 0 : index
    %c0_14 = arith.constant 0 : index
    %29 = vector.load %arg5[%c0_13, %c0_14] : memref<8x1xf32, #tpu.memory_space<vmem>>, vector<8x1xf32>
    tpu.vector_store %arg5[%c0_13, %c0_14], %17 {strides = array<i32>} : memref<8x1xf32, #tpu.memory_space<vmem>>, vector<8x1xf32>,
    return
  }
  func.func @transform_0(%arg0: i32, %arg1: i32) -> (i32, i32) {
    %c0_i32 = arith.constant 0 : i32
    %c0_i32_0 = arith.constant 0 : i32
    return %arg0, %c0_i32 : i32, i32
  }
  func.func @transform_1(%arg0: i32, %arg1: i32) -> (i32, i32) {
    %c0_i32 = arith.constant 0 : i32
    %c0_i32_0 = arith.constant 0 : i32
    return %arg0, %c0_i32 : i32, i32
  }
  func.func @transform_2(%arg0: i32, %arg1: i32) -> (i32, i32) {
    %c0_i32 = arith.constant 0 : i32
    %c0_i32_0 = arith.constant 0 : i32
    return %arg1, %c0_i32 : i32, i32
  }
  func.func @transform_3(%arg0: i32, %arg1: i32) -> (i32, i32) {
    %c0_i32 = arith.constant 0 : i32
    %c0_i32_0 = arith.constant 0 : i32
    return %arg0, %c0_i32 : i32, i32
  }
  func.func @transform_4(%arg0: i32, %arg1: i32) -> (i32, i32) {
    %c0_i32 = arith.constant 0 : i32
    %c0_i32_0 = arith.constant 0 : i32
    return %arg0, %c0_i32 : i32, i32
  }
  func.func @transform_5(%arg0: i32, %arg1: i32) -> (i32, i32) {
    %c0_i32 = arith.constant 0 : i32
    %c0_i32_0 = arith.constant 0 : i32
    return %arg0, %c0_i32 : i32, i32
  }
}

</mosaic_0001>

<llo_original>
// kernel: tpu_custom_call.1
$region0: #{tpu_custom_call.1}
  #allocation0 [shape = 'u32[]', space=smem, size = 0x4, offset = 0x4, fixed_abs, tag = 'smem constant byte address 0x4 - core index']
  #allocation1 [shape = 'u32[72,128]{1,0:T(1,128)}', space=vmem, size = 0x9000, scoped, tag = 'internal scratch']
  %s0 = inlined_call_operand.hbm [shape: bf16[8,128], index: 0, kind: input, shape index: {}]
  %s1 = inlined_call_operand.hbm [shape: bf16[8,128], index: 1, kind: input, shape index: {}]
  %s2 = inlined_call_operand.hbm [shape: bf16[128,128], index: 2, kind: input, shape index: {}]
  %s3 = inlined_call_operand.vmem [shape: f32[8,1], index: 3, kind: output, shape index: {0}]
  %s4 = inlined_call_operand.vmem [shape: f32[8,1], index: 4, kind: output, shape index: {1}]
  %s5 = inlined_call_operand.vmem [shape: f32[8,1], index: 5, kind: output, shape index: {2}]
  %6 = xla_tuple %s3, %s4, %s5
  %s7 = sld [smem:[#allocation0]]
  $region54: #{tpu_custom_call.1} parent=0
    _
  %s9 = ssub.s32 1, %s7
  %s10 = scalar_select 0, %s9, %s7
  $region1: #{tpu_custom_call.1} parent=0
    #allocation2 [shape = 'u8[2048]{0}', space=vmem, size = 0x800, scoped, tag = 'input window, operand 0, single buffered']
    #allocation3 [shape = 's32[1]{0}', space=sflag, size = 0x4, scoped, tag = 'scoped memory for tpu_custom_call.1']
    #allocation4 [shape = 'u8[2048]{0}', space=vmem, size = 0x800, scoped, tag = 'input window, operand 1, single buffered']
    #allocation5 [shape = 's32[1]{0}', space=sflag, size = 0x4, scoped, tag = 'scoped memory for tpu_custom_call.1']
    #allocation6 [shape = 'u8[32768]{0}', space=vmem, size = 0x8000, scoped, tag = 'input window, operand 2, single buffered']
    %11 = vsyncpa [#allocation3], 0
    %12 = vsyncpa [#allocation5], 0
    // Predicated region
    $region2: #{tpu_custom_call.1} parent=1 // pred_check
      _
    $region3: #{tpu_custom_call.1} parent=1 // pred_check_branch
      %14 = sbr.rel (0) target = $region5
    $region4: #{tpu_custom_call.1} parent=1 // pred_region
      %16 = vsyncadd [#allocation3], 0
      %s18 = sshll.u32 %s0, 4
      %s19 = int_to_ptr.hbm [resolvable:$true] %s18
      %s20 = sshll.u32 [#allocation2], 4
      %s21 = int_to_ptr.vmem [resolvable:$true] %s20
      %23 = dma.hbm_to_vmem [thread:$0]  %s19, 64, %s21, [#allocation3]
    $region5: #{tpu_custom_call.1} parent=1 // pred_fallthru
      _
    // Predicated region
    $region6: #{tpu_custom_call.1} parent=1 // pred_check
      _
    $region7: #{tpu_custom_call.1} parent=1 // pred_check_branch
      %25 = sbr.rel (0) target = $region9
    $region8: #{tpu_custom_call.1} parent=1 // pred_region
      %27 = vsyncadd [#allocation5], 0
      %s29 = sshll.u32 %s1, 4
      %s30 = int_to_ptr.hbm [resolvable:$true] %s29
      %s31 = sshll.u32 [#allocation4], 4
      %s32 = int_to_ptr.vmem [resolvable:$true] %s31
      %34 = dma.hbm_to_vmem [thread:$0]  %s30, 64, %s32, [#allocation5]
    $region9: #{tpu_custom_call.1} parent=1 // pred_fallthru
      _
    // Predicated region
    $region10: #{tpu_custom_call.1} parent=1 // pred_check
      _
    $region11: #{tpu_custom_call.1} parent=1 // pred_check_branch
      %36 = sbr.rel (0) target = $region13
    $region12: #{tpu_custom_call.1} parent=1 // pred_region
      %38 = vsyncadd [#allocation5], 0
      %s39 = sshll.u32 %s2, 4
      %s40 = int_to_ptr.hbm [resolvable:$true] %s39
      %s41 = sshll.u32 [#allocation6], 4
      %s42 = int_to_ptr.vmem [resolvable:$true] %s41
      %47 = dma.hbm_to_vmem [thread:$0]  %s40, 1024, %s42, [#allocation5], 64, 64, 4
    $region13: #{tpu_custom_call.1} parent=1 // pred_fallthru
      _
    // Predicated region
    $region14: #{tpu_custom_call.1} parent=1 // pred_check
      _
    $region15: #{tpu_custom_call.1} parent=1 // pred_check_branch
      %49 = sbr.rel (0) target = $region17
    $region16: #{tpu_custom_call.1} parent=1 // pred_region
      %51 = dma.done [#allocation3], 64
    $region17: #{tpu_custom_call.1} parent=1 // pred_fallthru
      _
    // Predicated region
    $region18: #{tpu_custom_call.1} parent=1 // pred_check
      _
    $region19: #{tpu_custom_call.1} parent=1 // pred_check_branch
      %53 = sbr.rel (0) target = $region21
    $region20: #{tpu_custom_call.1} parent=1 // pred_region
      %55 = dma.done [#allocation5], 64
    $region21: #{tpu_custom_call.1} parent=1 // pred_fallthru
      _
    // Predicated region
    $region22: #{tpu_custom_call.1} parent=1 // pred_check
      _
    $region23: #{tpu_custom_call.1} parent=1 // pred_check_branch
      %57 = sbr.rel (0) target = $region25
    $region24: #{tpu_custom_call.1} parent=1 // pred_region
      %59 = dma.done [#allocation5], 1024
    $region25: #{tpu_custom_call.1} parent=1 // pred_fallthru
      _
    %p60 = scmp.eq.s32.totalorder 0, 0
    // Predicated region
    $region26: #{tpu_custom_call.1} parent=1 // pred_check
      %p61 = pneg %p60
    $region27: #{tpu_custom_call.1} parent=1 // pred_check_branch
      %63 = sbr.rel (%p61) target = $region29
    $region28: #{tpu_custom_call.1} parent=1 // pred_region
      %vm64 = vcmask 7168
      %65 = vst.msk [vmem:[%s3] sm:$0xff] %vm64, -1e+30
      %66 = vst.msk [vmem:[%s4] sm:$0xff] %vm64, 0.0
      %v67 = vld [vmem:[#allocation4] sm:$0xf]
      %v68 = vunpack.c.l.bf16 %v67
      %v69 = vld [vmem:[#allocation2] sm:$0xf]
      %v70 = vunpack.c.l.bf16 %v69
      %v71 = vmul.f32 %v68, %v70
      %72 = vadd.xlane.f32.xlu0 %v71
      %v73 = vpop.xlane.xlu0 %72
      %74 = vst.msk [vmem:[%s5] sm:$0xff] %vm64, %v73
    $region29: #{tpu_custom_call.1} parent=1 // pred_fallthru
      _
    %v75 = vld [vmem:[#allocation2] sm:$0xf]
    %v76 = vld [vmem:[#allocation6] sm:$0xf]
    %v77 = vld [vmem:[#allocation6 + $0x4] sm:$0xf]
    %v78 = vld [vmem:[#allocation6 + $0x8] sm:$0xf]
    %v79 = vld [vmem:[#allocation6 + $0xc] sm:$0xf]
    %v80 = vld [vmem:[#allocation6 + $0x10] sm:$0xf]
    %v81 = vld [vmem:[#allocation6 + $0x14] sm:$0xf]
    %v82 = vld [vmem:[#allocation6 + $0x18] sm:$0xf]
    %v83 = vld [vmem:[#allocation6 + $0x1c] sm:$0xf]
    %v84 = vld [vmem:[#allocation6 + $0x20] sm:$0xf]
    %v85 = vld [vmem:[#allocation6 + $0x24] sm:$0xf]
    %v86 = vld [vmem:[#allocation6 + $0x28] sm:$0xf]
    %v87 = vld [vmem:[#allocation6 + $0x2c] sm:$0xf]
    %v88 = vld [vmem:[#allocation6 + $0x30] sm:$0xf]
    %v89 = vld [vmem:[#allocation6 + $0x34] sm:$0xf]
    %v90 = vld [vmem:[#allocation6 + $0x38] sm:$0xf]
    %v91 = vld [vmem:[#allocation6 + $0x3c] sm:$0xf]
    %v108 = vunpack.c.l.b16 %v76
    %v109 = vunpack.c.l.b16 %v77
    %v110 = vunpack.c.l.b16 %v78
    %v111 = vunpack.c.l.b16 %v79
    %v112 = vunpack.c.l.b16 %v80
    %v113 = vunpack.c.l.b16 %v81
    %v114 = vunpack.c.l.b16 %v82
    %v115 = vunpack.c.l.b16 %v83
    %v116 = vunpack.c.l.b16 %v84
    %v117 = vunpack.c.l.b16 %v85
    %v118 = vunpack.c.l.b16 %v86
    %v119 = vunpack.c.l.b16 %v87
    %v120 = vunpack.c.l.b16 %v88
    %v121 = vunpack.c.l.b16 %v89
    %v122 = vunpack.c.l.b16 %v90
    %v123 = vunpack.c.l.b16 %v91
    %v124 = vpack.c.b16 %v109, %v108
    %v125 = vpack.c.b16 %v111, %v110
    %v126 = vpack.c.b16 %v113, %v112
    %v127 = vpack.c.b16 %v115, %v114
    %v128 = vpack.c.b16 %v117, %v116
    %v129 = vpack.c.b16 %v119, %v118
    %v130 = vpack.c.b16 %v121, %v120
    %v131 = vpack.c.b16 %v123, %v122
    %140 = vmatpush.bf16.xpose.msra.mxu0 %v131
    %141 = vmatpush.bf16.xpose.msra.mxu0 %v130
    %142 = vmatpush.bf16.xpose.msra.mxu0 %v129
    %143 = vmatpush.bf16.xpose.msra.mxu0 %v128
    %144 = vmatpush.bf16.xpose.msra.mxu0 %v127
    %145 = vmatpush.bf16.xpose.msra.mxu0 %v126
    %146 = vmatpush.bf16.xpose.msra.mxu0 %v125
    %147 = vmatpush.bf16.xpose.msra.mxu0 %v124
    %148 = vmatmul.bf16.gmra.mxu0 %v75
    %v149 = vpop.f32.mrf.mxu0
    %v150 = vadd.f32 0.0, %v149
    %v151 = vpop.f32.mrf.mxu0
    %152 = vdwg.mxu0
    %v153 = vlaneseq
    %v154 = vand.u32 %v153, 127
    %s155 = smul.u32 0, 128
    %v156 = vstv %s155
    %v157 = vadd.s32 %v154, %v156
    %vm158 = vcmp.lt.s32.totalorder %v157, 32
    %v159 = vsel %vm158, %v150, -1e+30
    %v160 = vld [vmem:[%s3] sm:$0xff]
    %161 = vmax.xlane.f32.xlu0 %v159
    %v162 = vpop.xlane.xlu0 %161
    %v163 = vmax.f32 %v160, %v162
    %v164 = vld [vmem:[%s4] sm:$0xff]
    %v165 = vsub.f32 %v160, %v163
    %v166 = vmul.f32 %v165, 1.442695
    %v167 = vpow.pop %v166
    %v168 = vmul.f32 %v164, %v167
    %170 = vset.pattern.permute.xlu0 0
    %171 = vperm.xlu0 %170, %v163
    %v172 = vpop.permute.xlu0 %171
    %v174 = vsub.f32 %v159, %v172
    %v175 = vmul.f32 %v174, 1.442695
    %v176 = vpow.pop %v175
    %177 = vadd.xlane.f32.xlu0 %v176
    %v178 = vpop.xlane.xlu0 %177
    %v179 = vadd.f32 %v168, %v178
    %vm180 = vcmask 7168
    %181 = vst.msk [vmem:[%s4] sm:$0xff] %vm180, %v179
    %182 = vst.msk [vmem:[%s3] sm:$0xff] %vm180, %v163
    // Predicated region
    $region30: #{tpu_custom_call.1} parent=1 // pred_check
      _
    $region31: #{tpu_custom_call.1} parent=1 // pred_check_branch
      %184 = sbr.rel (0) target = $region33
    $region32: #{tpu_custom_call.1} parent=1 // pred_region
      _
    $region33: #{tpu_custom_call.1} parent=1 // pred_fallthru
      _
    // Predicated region
    $region34: #{tpu_custom_call.1} parent=1 // pred_check
      _
    $region35: #{tpu_custom_call.1} parent=1 // pred_check_branch
      %186 = sbr.rel (0) target = $region37
    $region36: #{tpu_custom_call.1} parent=1 // pred_region
      _
    $region37: #{tpu_custom_call.1} parent=1 // pred_fallthru
      _
    // Predicated region
    $region38: #{tpu_custom_call.1} parent=1 // pred_check
      _
    $region39: #{tpu_custom_call.1} parent=1 // pred_check_branch
      %188 = sbr.rel (0) target = $region41
    $region40: #{tpu_custom_call.1} parent=1 // pred_region
      _
    $region41: #{tpu_custom_call.1} parent=1 // pred_fallthru
      _
    // Predicated region
    $region42: #{tpu_custom_call.1} parent=1 // pred_check
      _
    $region43: #{tpu_custom_call.1} parent=1 // pred_check_branch
      %190 = sbr.rel (0) target = $region45
    $region44: #{tpu_custom_call.1} parent=1 // pred_region
      _
    $region45: #{tpu_custom_call.1} parent=1 // pred_fallthru
      _
    // Predicated region
    $region46: #{tpu_custom_call.1} parent=1 // pred_check
      _
    $region47: #{tpu_custom_call.1} parent=1 // pred_check_branch
      %192 = sbr.rel (0) target = $region49
    $region48: #{tpu_custom_call.1} parent=1 // pred_region
      _
    $region49: #{tpu_custom_call.1} parent=1 // pred_fallthru
      _
    // Predicated region
    $region50: #{tpu_custom_call.1} parent=1 // pred_check
      _
    $region51: #{tpu_custom_call.1} parent=1 // pred_check_branch
      %194 = sbr.rel (0) target = $region53
    $region52: #{tpu_custom_call.1} parent=1 // pred_region
      _
    $region53: #{tpu_custom_call.1} parent=1 // pred_fallthru
      _
    %195 = vsyncpa [#allocation3], 1
    %196 = vsyncpa [#allocation5], 1

</llo_original>
